<compile_context>
chip_gen: v7x
topology: tpu7x:2x2x1
jax: 0.10.0
libtpu: 0.0.40
codegen_flags: <defaults>
</compile_context>

<pallas_src>
import jax
import jax.numpy as jnp
from jax.experimental import pallas as pl
from jax.experimental.pallas import tpu as pltpu


def _swish(x):
    return x * jax.nn.sigmoid(x)


# ------------------------------ Pallas kernel ------------------------------

def _cond_mlp_res_kernel(x_ref, lat_ref, w1_ref, b1_ref, w2_ref, b2_ref,
                         wf_ref, bf_ref, o_ref):
    """One (R, F) row slab:
       fused FiLM linears (single wide matmul) + fc1 -> FiLM -> swish
       -> fc2 -> FiLM -> swish -> +residual."""
    f = o_ref.shape[-1]
    x = x_ref[...]                                   # (R, F), input dtype
    lat = lat_ref[...]                               # (R, L), already bf16

    def mm(a_bf16, w_ref, b_ref):
        return jnp.dot(a_bf16, w_ref[...],
                       preferred_element_type=jnp.float32) + b_ref[...]

    # Single (R, L) x (L, 4F) MXU push for both FiLM linears:
    #   columns = [gain1 | bias1 | gain2 | bias2]
    film = mm(lat, wf_ref, bf_ref)                   # (R, 4F) f32
    g1, bb1 = film[:, 0 * f:1 * f], film[:, 1 * f:2 * f]
    g2, bb2 = film[:, 2 * f:3 * f], film[:, 3 * f:4 * f]

    h = mm(x.astype(jnp.bfloat16), w1_ref, b1_ref)   # (R, F) f32
    h = _swish(g1 * h + bb1)                         # f32 VPU/EUP (v5e-safe)
    h = mm(h.astype(jnp.bfloat16), w2_ref, b2_ref)
    h = _swish(g2 * h + bb2)
    o_ref[...] = (x.astype(jnp.float32) + h).astype(o_ref.dtype)


# ------------------------------ tiling helpers ------------------------------

def _full_spec(shape):
    # Weights/biases: same (full) block every step; Pallas elides the re-copy
    # since the block index never changes, so the extra pipeline buffer is
    # only a few tens of KiB of VMEM.
    return pl.BlockSpec(shape, lambda *_, n=len(shape): (0,) * n)


def _pick_row_tile(m_rows, block_m):
    """Row tile for the flat (per-row latent) path."""
    if m_rows <= block_m:
        return m_rows                    # single block == full dim (always legal)
    tm = min(block_m, -(-m_rows // 4))   # keep >=4 grid steps for megacore
    return max(16, (tm // 16) * 16)      # sublane-tile friendly (f32 & bf16)


def _pick_d1_tile(batch, d1, d2, block_m):
    """Number of d1 values per block for the 4-D (FiLM broadcast) path."""
    divs = [k for k in range(1, d1 + 1) if d1 % k == 0]
    # k*d2 rows must be a multiple of 8 (f32 sublane tiling) unless full.
    valid = [k for k in divs if (k * d2) % 8 == 0 or k == d1]
    fitting = [k for k in valid if k * d2 <= block_m] or valid
    # Prefer >=4 total grid steps (v7x megacore) once blocks are already big.
    pref = [k for k in fitting if batch * (d1 // k) >= 4 and k * d2 >= 512]
    return max(pref or fitting)


# --------------------------------- wrapper ---------------------------------

def cond_mlp_res_block(x, latent, params, *, block_m=2048):
    """CondMLPResBlock1d.forward.

    Supported shapes (matching the PyTorch reference):
      * x: (B, S, F),      latent: (B, S, L)   -> per-row FiLM
      * x: (B, D1, D2, F), latent: (B, D2, L)  -> FiLM broadcast over D1
    """
    F = params['fc1_w'].shape[0]
    L = params['lfc1_w'].shape[0]
    orig_shape = x.shape
    bf16, f32 = jnp.bfloat16, jnp.float32

    # bf16 MXU operands (weights cast at trace time); biases stay f32.
    w1 = params['fc1_w'].astype(bf16)
    w2 = params['fc2_w'].astype(bf16)
    b1 = params['fc1_b'].reshape(1, F).astype(f32)
    b2 = params['fc2_b'].reshape(1, F).astype(f32)
    # Fused FiLM weight (L, 4F) = [gain1 | bias1 | gain2 | bias2].
    wf = jnp.concatenate([params['lfc1_w'], params['lfc2_w']], axis=1).astype(bf16)
    bf = jnp.concatenate([params['lfc1_b'], params['lfc2_b']]
                         ).reshape(1, 4 * F).astype(f32)
    weights = (w1, b1, w2, b2, wf, bf)
    weight_specs = [_full_spec((F, F)), _full_spec((1, F)),
                    _full_spec((F, F)), _full_spec((1, F)),
                    _full_spec((L, 4 * F)), _full_spec((1, 4 * F))]

    if x.ndim == 3:
        B, S, Fx = x.shape
        assert Fx == F and latent.shape == (B, S, L)
        M = B * S
        xf = x.reshape(M, F)
        latf = latent.reshape(M, L).astype(bf16)
        tm = _pick_row_tile(M, block_m)
        grid = (pl.cdiv(M, tm),)
        x_spec = pl.BlockSpec((tm, F), lambda i: (i, 0))
        lat_spec = pl.BlockSpec((tm, L), lambda i: (i, 0))
        out_spec = pl.BlockSpec((tm, F), lambda i: (i, 0))
        out_shape = jax.ShapeDtypeStruct((M, F), x.dtype)
        semantics = ("parallel",)
    elif x.ndim == 4:
        B, D1, D2, Fx = x.shape
        assert Fx == F and latent.shape == (B, D2, L)
        k = _pick_d1_tile(B, D1, D2, block_m)   # d1 values per block
        R = k * D2                              # rows per block
        xf = x.reshape(B, D1 * D2, F)           # free (metadata-only) reshape
        # Tile latent to ONE block's worth of rows only (k*D2, not D1*D2); the
        # same block is re-used for every d1-tile via a constant index_map, so
        # the full D1-broadcast is never written to / re-read from HBM.
        latf = jnp.tile(latent.astype(bf16), (1, k, 1))        # (B, k*D2, L)
        grid = (B, D1 // k)
        x_spec = pl.BlockSpec((None, R, F), lambda b, j: (b, j, 0))
        lat_spec = pl.BlockSpec((None, R, L), lambda b, j: (b, 0, 0))
        out_spec = pl.BlockSpec((None, R, F), lambda b, j: (b, j, 0))
        out_shape = jax.ShapeDtypeStruct((B, D1 * D2, F), x.dtype)
        semantics = ("parallel", "arbitrary")
    else:
        raise ValueError("x must be 3-D or 4-D")

    out = pl.pallas_call(
        _cond_mlp_res_kernel,
        out_shape=out_shape,
        grid=grid,
        in_specs=[x_spec, lat_spec] + weight_specs,
        out_specs=out_spec,
        compiler_params=pltpu.CompilerParams(dimension_semantics=semantics),
    )(xf, latf, *weights)
    return out.reshape(orig_shape)


# --------------------------- references & params ----------------------------

def reference_forward(x, latent, params):
    """Pure-JAX f32 reference, mirrors the PyTorch module exactly."""
    F = params['fc1_w'].shape[0]
    l1 = latent @ params['lfc1_w'] + params['lfc1_b']
    l2 = latent @ params['lfc2_w'] + params['lfc2_b']
    g1, bb1 = l1[..., :F], l1[..., F:]
    g2, bb2 = l2[..., :F], l2[..., F:]
    if x.ndim > 3:
        g1, bb1, g2, bb2 = (t[:, None] for t in (g1, bb1, g2, bb2))
    h = x @ params['fc1_w'] + params['fc1_b']
    h = _swish(g1 * h + bb1)
    h = h @ params['fc2_w'] + params['fc2_b']
    h = _swish(g2 * h + bb2)
    return x + h


def reference_forward_bf16(x, latent, params):
    """Precision-matched reference (bf16 matmul operands, f32 accumulate) used
    to catch FiLM-packing / bias / ordering bugs with a tight tolerance."""
    bf16, f32 = jnp.bfloat16, jnp.float32
    F = params['fc1_w'].shape[0]

    def mm(a, w, b):
        return jnp.dot(a.astype(bf16), w.astype(bf16),
                       preferred_element_type=f32) + b

    l1 = mm(latent, params['lfc1_w'], params['lfc1_b'])
    l2 = mm(latent, params['lfc2_w'], params['lfc2_b'])
    g1, bb1 = l1[..., :F], l1[..., F:]
    g2, bb2 = l2[..., :F], l2[..., F:]
    if x.ndim > 3:
        g1, bb1, g2, bb2 = (t[:, None] for t in (g1, bb1, g2, bb2))
    h = mm(x, params['fc1_w'], params['fc1_b'])
    h = _swish(g1 * h + bb1)
    h = mm(h, params['fc2_w'], params['fc2_b'])
    h = _swish(g2 * h + bb2)
    return x.astype(f32) + h


def init_params(key, filters=64, latent_dim=64):
    ks = jax.random.split(key, 8)
    std = 0.05  # NOTE: PyTorch inits fc1/fc2 with std=1e-5; a larger std gives
                # a non-degenerate numerical test; semantics are unchanged.

    def w(k, shape):
        return std * jax.random.normal(k, shape, jnp.float32)

    return {
        'fc1_w': w(ks[0], (filters, filters)),          # stored (in, out) = W^T
        'fc1_b': w(ks[1], (filters,)),
        'fc2_w': w(ks[2], (filters, filters)),
        'fc2_b': w(ks[3], (filters,)),
        'lfc1_w': w(ks[4], (latent_dim, 2 * filters)),  # [gain1 | bias1]
        'lfc1_b': w(ks[5], (2 * filters,)),
        'lfc2_w': w(ks[6], (latent_dim, 2 * filters)),  # [gain2 | bias2]
        'lfc2_b': w(ks[7], (2 * filters,)),
    }
    # TODO(synk): spectral_norm=True reparameterization (train-time power
    # iteration) is not implemented; weights are assumed already normalized.


# ----------------------------------- main -----------------------------------

if __name__ == "__main__":
    filters, latent_dim = 64, 64
    key = jax.random.PRNGKey(0)
    kp, kx1, kl1, kx2, kl2 = jax.random.split(key, 5)
    params = init_params(kp, filters, latent_dim)

    # 4-D path (as used inside the EBM): x (B, chunks, relations, F),
    # latent (B, relations, L); FiLM broadcast over the chunk dim.
    B, D1, D2 = 2, 8, 6
    x4 = jax.random.normal(kx1, (B, D1, D2, filters), jnp.float32)
    lat4 = jax.random.normal(kl1, (B, D2, latent_dim), jnp.float32)
    out4 = jax.block_until_ready(cond_mlp_res_block(x4, lat4, params))
    assert out4.shape == x4.shape, out4.shape
    assert bool(jnp.all(jnp.isfinite(out4)))
    err4_f32 = float(jnp.max(jnp.abs(out4 - reference_forward(x4, lat4, params))))
    err4_bf = float(jnp.max(jnp.abs(out4 - reference_forward_bf16(x4, lat4, params))))
    assert err4_f32 < 5e-2, err4_f32     # bf16-vs-f32 matmul tradeoff (documented)
    assert err4_bf < 2e-3, err4_bf       # tight check on FiLM packing / biases

    # 3-D path: x (B, S, F), latent (B, S, L).
    S = 16
    x3 = jax.random.normal(kx2, (B, S, filters), jnp.float32)
    lat3 = jax.random.normal(kl2, (B, S, latent_dim), jnp.float32)
    out3 = jax.block_until_ready(cond_mlp_res_block(x3, lat3, params))
    assert out3.shape == x3.shape, out3.shape
    assert bool(jnp.all(jnp.isfinite(out3)))
    err3_f32 = float(jnp.max(jnp.abs(out3 - reference_forward(x3, lat3, params))))
    err3_bf = float(jnp.max(jnp.abs(out3 - reference_forward_bf16(x3, lat3, params))))
    assert err3_f32 < 5e-2, err3_f32
    assert err3_bf < 2e-3, err3_bf

    print("KERNEL_OK")
</pallas_src>

<mosaic_0001>
module attributes {stable_mosaic.version = 11 : i64} {
  func.func @_cond_mlp_res_kernel(%arg0: i32, %arg1: i32, %arg2: memref<1x48x64xf32, #tpu.memory_space<vmem>>, %arg3: memref<1x48x64xbf16, #tpu.memory_space<vmem>>, %arg4: memref<64x64xbf16, #tpu.memory_space<vmem>>, %arg5: memref<1x64xf32, #tpu.memory_space<vmem>>, %arg6: memref<64x64xbf16, #tpu.memory_space<vmem>>, %arg7: memref<1x64xf32, #tpu.memory_space<vmem>>, %arg8: memref<64x256xbf16, #tpu.memory_space<vmem>>, %arg9: memref<1x256xf32, #tpu.memory_space<vmem>>, %arg10: memref<1x48x64xf32, #tpu.memory_space<vmem>>) attributes {dimension_semantics = [#tpu.dimension_semantics<parallel>, #tpu.dimension_semantics<arbitrary>], iteration_bounds = array<i64: 2, 1>, scalar_prefetch = 0 : i64, scratch_operands = 0 : i64, tpu.core_type = #tpu.core_type<tc>, window_params = [{transform_indices = @transform_0, window_bounds = array<i64: 1, 48, 64>}, {transform_indices = @transform_1, window_bounds = array<i64: 1, 48, 64>}, {pipeline_mode = #tpu.pipeline_mode<synchronous>, transform_indices = @transform_2, window_bounds = array<i64: 64, 64>}, {pipeline_mode = #tpu.pipeline_mode<synchronous>, transform_indices = @transform_3, window_bounds = array<i64: 1, 64>}, {pipeline_mode = #tpu.pipeline_mode<synchronous>, transform_indices = @transform_4, window_bounds = array<i64: 64, 64>}, {pipeline_mode = #tpu.pipeline_mode<synchronous>, transform_indices = @transform_5, window_bounds = array<i64: 1, 64>}, {pipeline_mode = #tpu.pipeline_mode<synchronous>, transform_indices = @transform_6, window_bounds = array<i64: 64, 256>}, {pipeline_mode = #tpu.pipeline_mode<synchronous>, transform_indices = @transform_7, window_bounds = array<i64: 1, 256>}, {transform_indices = @transform_8, window_bounds = array<i64: 1, 48, 64>}]} {
    %c0 = arith.constant 0 : index
    %c0_0 = arith.constant 0 : index
    %c0_1 = arith.constant 0 : index
    %0 = vector.load %arg2[%c0, %c0_0, %c0_1] : memref<1x48x64xf32, #tpu.memory_space<vmem>>, vector<1x48x64xf32>
    %1 = vector.shape_cast %0 : vector<1x48x64xf32> to vector<48x64xf32>
    %c0_2 = arith.constant 0 : index
    %c0_3 = arith.constant 0 : index
    %c0_4 = arith.constant 0 : index
    %2 = vector.load %arg3[%c0_2, %c0_3, %c0_4] : memref<1x48x64xbf16, #tpu.memory_space<vmem>>, vector<1x48x64xbf16>
    %3 = vector.shape_cast %2 : vector<1x48x64xbf16> to vector<48x64xbf16>
    %c0_5 = arith.constant 0 : index
    %c0_6 = arith.constant 0 : index
    %4 = vector.load %arg8[%c0_5, %c0_6] : memref<64x256xbf16, #tpu.memory_space<vmem>>, vector<64x256xbf16>
    %cst = arith.constant dense<0.000000e+00> : vector<48x256xf32>
    %5 = tpu.matmul %3, %4, %cst {dimension_numbers = #tpu.dot_dimension_numbers<[1], [0], [0], [1], [0, 0, 1, 1], [], []>} : vector<48x64xbf16>, vector<64x256xbf16>, vector<48x256xf32> -> vector<48x256xf32>
    %c0_7 = arith.constant 0 : index
    %c0_8 = arith.constant 0 : index
    %6 = vector.load %arg9[%c0_7, %c0_8] : memref<1x256xf32, #tpu.memory_space<vmem>>, vector<1x256xf32>
    %7 = vector.broadcast %6 : vector<1x256xf32> to vector<48x256xf32>
    %8 = arith.addf %5, %7 : vector<48x256xf32>
    %9 = vector.extract_strided_slice %8 {offsets = [0, 0], sizes = [48, 64], strides = [1, 1]} : vector<48x256xf32> to vector<48x64xf32>
    %10 = vector.extract_strided_slice %8 {offsets = [0, 64], sizes = [48, 64], strides = [1, 1]} : vector<48x256xf32> to vector<48x64xf32>
    %11 = vector.extract_strided_slice %8 {offsets = [0, 128], sizes = [48, 64], strides = [1, 1]} : vector<48x256xf32> to vector<48x64xf32>
    %12 = vector.extract_strided_slice %8 {offsets = [0, 192], sizes = [48, 64], strides = [1, 1]} : vector<48x256xf32> to vector<48x64xf32>
    %13 = arith.truncf %1 : vector<48x64xf32> to vector<48x64xbf16>
    %c0_9 = arith.constant 0 : index
    %c0_10 = arith.constant 0 : index
    %14 = vector.load %arg4[%c0_9, %c0_10] : memref<64x64xbf16, #tpu.memory_space<vmem>>, vector<64x64xbf16>
    %cst_11 = arith.constant dense<0.000000e+00> : vector<48x64xf32>
    %15 = tpu.matmul %13, %14, %cst_11 {dimension_numbers = #tpu.dot_dimension_numbers<[1], [0], [0], [1], [0, 0, 1, 1], [], []>} : vector<48x64xbf16>, vector<64x64xbf16>, vector<48x64xf32> -> vector<48x64xf32>
    %c0_12 = arith.constant 0 : index
    %c0_13 = arith.constant 0 : index
    %16 = vector.load %arg5[%c0_12, %c0_13] : memref<1x64xf32, #tpu.memory_space<vmem>>, vector<1x64xf32>
    %17 = vector.broadcast %16 : vector<1x64xf32> to vector<48x64xf32>
    %18 = arith.addf %15, %17 : vector<48x64xf32>
    %19 = arith.mulf %9, %18 : vector<48x64xf32>
    %20 = arith.addf %19, %10 : vector<48x64xf32>
    %21 = arith.negf %20 : vector<48x64xf32>
    %22 = math.exp %21 : vector<48x64xf32>
    %cst_14 = arith.constant 1.000000e+00 : f32
    %23 = vector.broadcast %cst_14 : f32 to vector<48x64xf32>
    %24 = arith.addf %23, %22 : vector<48x64xf32>
    %25 = arith.divf %23, %24 : vector<48x64xf32>
    %26 = arith.mulf %20, %25 : vector<48x64xf32>
    %27 = arith.truncf %26 : vector<48x64xf32> to vector<48x64xbf16>
    %c0_15 = arith.constant 0 : index
    %c0_16 = arith.constant 0 : index
    %28 = vector.load %arg6[%c0_15, %c0_16] : memref<64x64xbf16, #tpu.memory_space<vmem>>, vector<64x64xbf16>
    %cst_17 = arith.constant dense<0.000000e+00> : vector<48x64xf32>
    %29 = tpu.matmul %27, %28, %cst_17 {dimension_numbers = #tpu.dot_dimension_numbers<[1], [0], [0], [1], [0, 0, 1, 1], [], []>} : vector<48x64xbf16>, vector<64x64xbf16>, vector<48x64xf32> -> vector<48x64xf32>
    %c0_18 = arith.constant 0 : index
    %c0_19 = arith.constant 0 : index
    %30 = vector.load %arg7[%c0_18, %c0_19] : memref<1x64xf32, #tpu.memory_space<vmem>>, vector<1x64xf32>
    %31 = vector.broadcast %30 : vector<1x64xf32> to vector<48x64xf32>
    %32 = arith.addf %29, %31 : vector<48x64xf32>
    %33 = arith.mulf %11, %32 : vector<48x64xf32>
    %34 = arith.addf %33, %12 : vector<48x64xf32>
    %35 = arith.negf %34 : vector<48x64xf32>
    %36 = math.exp %35 : vector<48x64xf32>
    %cst_20 = arith.constant 1.000000e+00 : f32
    %37 = vector.broadcast %cst_20 : f32 to vector<48x64xf32>
    %38 = arith.addf %37, %36 : vector<48x64xf32>
    %39 = arith.divf %37, %38 : vector<48x64xf32>
    %40 = arith.mulf %34, %39 : vector<48x64xf32>
    %41 = arith.addf %1, %40 : vector<48x64xf32>
    %c0_21 = arith.constant 0 : index
    %c0_22 = arith.constant 0 : index
    %c0_23 = arith.constant 0 : index
    %42 = vector.load %arg10[%c0_21, %c0_22, %c0_23] : memref<1x48x64xf32, #tpu.memory_space<vmem>>, vector<1x48x64xf32>
    %43 = vector.shape_cast %42 : vector<1x48x64xf32> to vector<48x64xf32>
    %44 = vector.shape_cast %41 : vector<48x64xf32> to vector<1x48x64xf32>
    tpu.vector_store %arg10[%c0_21, %c0_22, %c0_23], %44 {strides = array<i32>} : memref<1x48x64xf32, #tpu.memory_space<vmem>>, vector<1x48x64xf32>,
    return
  }
  func.func @transform_0(%arg0: i32, %arg1: i32) -> (i32, i32, i32) {
    %c0_i32 = arith.constant 0 : i32
    %c0_i32_0 = arith.constant 0 : i32
    return %arg0, %arg1, %c0_i32 : i32, i32, i32
  }
  func.func @transform_1(%arg0: i32, %arg1: i32) -> (i32, i32, i32) {
    %c0_i32 = arith.constant 0 : i32
    %c0_i32_0 = arith.constant 0 : i32
    %c0_i32_1 = arith.constant 0 : i32
    return %arg0, %c0_i32, %c0_i32_0 : i32, i32, i32
  }
  func.func @transform_2(%arg0: i32, %arg1: i32) -> (i32, i32) {
    %c0_i32 = arith.constant 0 : i32
    %c0_i32_0 = arith.constant 0 : i32
    %c0_i32_1 = arith.constant 0 : i32
    return %c0_i32, %c0_i32_0 : i32, i32
  }
  func.func @transform_3(%arg0: i32, %arg1: i32) -> (i32, i32) {
    %c0_i32 = arith.constant 0 : i32
    %c0_i32_0 = arith.constant 0 : i32
    %c0_i32_1 = arith.constant 0 : i32
    return %c0_i32, %c0_i32_0 : i32, i32
  }
  func.func @transform_4(%arg0: i32, %arg1: i32) -> (i32, i32) {
    %c0_i32 = arith.constant 0 : i32
    %c0_i32_0 = arith.constant 0 : i32
    %c0_i32_1 = arith.constant 0 : i32
    return %c0_i32, %c0_i32_0 : i32, i32
  }
  func.func @transform_5(%arg0: i32, %arg1: i32) -> (i32, i32) {
    %c0_i32 = arith.constant 0 : i32
    %c0_i32_0 = arith.constant 0 : i32
    %c0_i32_1 = arith.constant 0 : i32
    return %c0_i32, %c0_i32_0 : i32, i32
  }
  func.func @transform_6(%arg0: i32, %arg1: i32) -> (i32, i32) {
    %c0_i32 = arith.constant 0 : i32
    %c0_i32_0 = arith.constant 0 : i32
    %c0_i32_1 = arith.constant 0 : i32
    return %c0_i32, %c0_i32_0 : i32, i32
  }
  func.func @transform_7(%arg0: i32, %arg1: i32) -> (i32, i32) {
    %c0_i32 = arith.constant 0 : i32
    %c0_i32_0 = arith.constant 0 : i32
    %c0_i32_1 = arith.constant 0 : i32
    return %c0_i32, %c0_i32_0 : i32, i32
  }
  func.func @transform_8(%arg0: i32, %arg1: i32) -> (i32, i32, i32) {
    %c0_i32 = arith.constant 0 : i32
    %c0_i32_0 = arith.constant 0 : i32
    return %arg0, %arg1, %c0_i32 : i32, i32, i32
  }
}

</mosaic_0001>

<llo_original>
// kernel: tpu_custom_call.1
$region0: #{tpu_custom_call.1}
  #allocation0 [shape = 'u32[]', space=smem, size = 0x4, offset = 0x4, fixed_abs, tag = 'smem constant byte address 0x4 - core index']
  #allocation1 [shape = 'u32[144,128]{1,0:T(1,128)}', space=vmem, size = 0x12000, scoped, tag = 'internal scratch']
  %s0 = inlined_call_operand.hbm [shape: f32[2,48,64], index: 0, kind: input, shape index: {}]
  %s1 = inlined_call_operand.hbm [shape: bf16[2,48,64], index: 1, kind: input, shape index: {}]
  %s2 = inlined_call_operand.hbm [shape: bf16[64,64], index: 2, kind: input, shape index: {}]
  %s3 = inlined_call_operand.vmem [shape: f32[1,64], index: 3, kind: input, shape index: {}]
  %s4 = inlined_call_operand.hbm [shape: bf16[64,64], index: 4, kind: input, shape index: {}]
  %s5 = inlined_call_operand.vmem [shape: f32[1,64], index: 5, kind: input, shape index: {}]
  %s6 = inlined_call_operand.hbm [shape: bf16[64,256], index: 6, kind: input, shape index: {}]
  %s7 = inlined_call_operand.vmem [shape: f32[1,256], index: 7, kind: input, shape index: {}]
  %s8 = inlined_call_operand.hbm [shape: f32[2,48,64], index: 8, kind: output, shape index: {}]
  %s9 = sld [smem:[#allocation0]]
  $region85: #{tpu_custom_call.1} parent=0
    _
  %s11 = ssub.s32 1, %s9
  %s12 = scalar_select 0, %s11, %s9
  $region1: #{tpu_custom_call.1} parent=0
    #allocation2 [shape = 'u8[49152]{0}', space=vmem, size = 0xc000, scoped, tag = 'input window, operand 0']
    #allocation3 [shape = 's32[2]{0}', space=sflag, size = 0x8, scoped, tag = 'scoped memory for tpu_custom_call.1']
    #allocation4 [shape = 's32[2]{0}', space=sflag, size = 0x8, scoped, tag = 'scoped memory for tpu_custom_call.1']
    #allocation5 [shape = 'u8[24576]{0}', space=vmem, size = 0x6000, scoped, tag = 'input window, operand 1']
    #allocation6 [shape = 's32[2]{0}', space=sflag, size = 0x8, scoped, tag = 'scoped memory for tpu_custom_call.1']
    #allocation7 [shape = 'u8[16384]{0}', space=vmem, size = 0x4000, scoped, tag = 'input window, operand 2, single buffered']
    #allocation8 [shape = 'u8[16384]{0}', space=vmem, size = 0x4000, scoped, tag = 'input window, operand 4, single buffered']
    #allocation9 [shape = 's32[1]{0}', space=sflag, size = 0x4, scoped, tag = 'scoped memory for tpu_custom_call.1']
    #allocation10 [shape = 'u8[32768]{0}', space=vmem, size = 0x8000, scoped, tag = 'input window, operand 6, single buffered']
    #allocation11 [shape = 'u8[49152]{0}', space=vmem, size = 0xc000, scoped, tag = 'output window, operand 0']
    %13 = vsyncpa [#allocation3], 0
    %s14 = scalar_lea.sflag [#allocation3], 1
    %15 = vsyncpa %s14, 0
    %16 = vsyncpa [#allocation6], 0
    %s17 = scalar_lea.sflag [#allocation6], 1
    %18 = vsyncpa %s17, 0
    %19 = vsyncpa [#allocation9], 0
    %20 = vsyncpa [#allocation4], 0
    %s21 = scalar_lea.sflag [#allocation4], 1
    %22 = vsyncpa %s21, 0
    loop: start=0, step=1, limit=4
    $region2: #{tpu_custom_call.1} parent=1 // loop_pre_header
      _
    $region3: #{tpu_custom_call.1} parent=1 // loop_header
      %s24 = sphi 0, %s28
      %p25 = scmp.ge.s32.totalorder %s24, 4
      %s31 = sphi 0, %s43
      %s32 = sphi 0, %s39
      %s33 = sphi 0, %s31
      %s34 = sphi 0, %s32
      %s35 = sphi 0, %s33
      %s36 = sphi 0, %s34
      %s48 = sphi 0, %s50
      %s51 = sphi 0, %s48
      %s52 = sphi 0, %s51
      %s68 = sphi 0, %s52
      %s74 = sphi 0, %s76
      %s77 = sphi 0, %s74
      %s78 = sphi 0, %s77
      %s94 = sphi 0, %s78
      %s98 = sphi 0, %s98
      %s100 = sphi 0, %s98
      %s101 = sphi 0, %s100
      %s115 = sphi 0, %s101
      %s119 = sphi 0, %s119
      %s121 = sphi 0, %s119
      %s122 = sphi 0, %s121
      %s136 = sphi 0, %s122
      %s140 = sphi 0, %s140
      %s142 = sphi 0, %s140
      %s143 = sphi 0, %s142
      %s157 = sphi 0, %s143
      %s161 = sphi 0, %s161
      %s163 = sphi 0, %s161
      %s164 = sphi 0, %s163
      %s178 = sphi 0, %s164
      %s182 = sphi 0, %s182
      %s184 = sphi 0, %s182
      %s185 = sphi 0, %s184
      %s199 = sphi 0, %s185
      %s203 = sphi 0, %s203
      %s205 = sphi 0, %s203
      %s206 = sphi 0, %s205
      %s220 = sphi 0, %s206
      %s228 = sphi 0, %s230
      %s231 = sphi 0, %s228
      %s232 = sphi 0, %s231
      %s248 = sphi 0, %s232
    $region4: #{tpu_custom_call.1} parent=1 // loop_header_branch
      %27 = sbr.rel (%p25) target = $region8
    $region5: #{tpu_custom_call.1} parent=1 // loop_body
      %s29 = ssub.s32 %s24, 1
      %s30 = ssub.s32 %s24, 2
      %s37 = sadd.s32 1, %s32
      %p38 = scmp.ge.s32.totalorder %s37, 1
      %s39 = scalar_select %p38, 0, %s37
      %s40 = sadd.s32 1, %s31
      %s41 = scalar_select %p38, %s40, %s31
      %p42 = scmp.ge.s32.totalorder %s41, 2
      %s43 = scalar_select %p42, 0, %s41
      %s44 = ssub.s32 %s31, %s43
      %s45 = ssub.s32 %s32, %s39
      %s46 = sor.u32 %s44, %s45
      %p47 = scmp.eq.s32.totalorder %s46, 0
      %s49 = sadd.s32 %s48, 1
      %s50 = scalar_select %p47, %s48, %s49
      %p53 = pneg %p47
      %p54 = scmp.eq.s32.totalorder %s24, 1
      %p55 = por %p53, %p54
      %p56 = scmp.ne.s32.totalorder %s48, %s51
      %p57 = scmp.eq.s32.totalorder %s24, 0
      %p58 = por %p56, %p57
      %p59 = scmp.ne.s32.totalorder %s48, %s51
      %p60 = scmp.eq.s32.totalorder %s29, 1
      %p61 = por %p59, %p60
      %p62 = scmp.ne.s32.totalorder %s51, %s52
      %p63 = scmp.eq.s32.totalorder %s29, 0
      %p64 = por %p62, %p63
      %p65 = scmp.ne.s32.totalorder %s51, %s52
      %p66 = scmp.eq.s32.totalorder %s30, 1
      %p67 = por %p65, %p66
      %p69 = scmp.ne.s32.totalorder %s52, %s68
      %p70 = scmp.eq.s32.totalorder %s30, 0
      %p71 = por %p69, %p70
      %s72 = ssub.s32 %s31, %s43
      %p73 = scmp.eq.s32.totalorder %s72, 0
      %s75 = sadd.s32 %s74, 1
      %s76 = scalar_select %p73, %s74, %s75
      %p79 = pneg %p73
      %p80 = scmp.eq.s32.totalorder %s24, 1
      %p81 = por %p79, %p80
      %p82 = scmp.ne.s32.totalorder %s74, %s77
      %p83 = scmp.eq.s32.totalorder %s24, 0
      %p84 = por %p82, %p83
      %p85 = scmp.ne.s32.totalorder %s74, %s77
      %p86 = scmp.eq.s32.totalorder %s29, 1
      %p87 = por %p85, %p86
      %p88 = scmp.ne.s32.totalorder %s77, %s78
      %p89 = scmp.eq.s32.totalorder %s29, 0
      %p90 = por %p88, %p89
      %p91 = scmp.ne.s32.totalorder %s77, %s78
      %p92 = scmp.eq.s32.totalorder %s30, 1
      %p93 = por %p91, %p92
      %p95 = scmp.ne.s32.totalorder %s78, %s94
      %p96 = scmp.eq.s32.totalorder %s30, 0
      %p97 = por %p95, %p96
      %s99 = sadd.s32 %s98, 1
      %p102 = scmp.eq.s32.totalorder %s24, 1
      %p103 = scmp.ne.s32.totalorder %s98, %s100
      %p104 = scmp.eq.s32.totalorder %s24, 0
      %p105 = por %p103, %p104
      %p106 = scmp.ne.s32.totalorder %s98, %s100
      %p107 = scmp.eq.s32.totalorder %s29, 1
      %p108 = por %p106, %p107
      %p109 = scmp.ne.s32.totalorder %s100, %s101
      %p110 = scmp.eq.s32.totalorder %s29, 0
      %p111 = por %p109, %p110
      %p112 = scmp.ne.s32.totalorder %s100, %s101
      %p113 = scmp.eq.s32.totalorder %s30, 1
      %p114 = por %p112, %p113
      %p116 = scmp.ne.s32.totalorder %s101, %s115
      %p117 = scmp.eq.s32.totalorder %s30, 0
      %p118 = por %p116, %p117
      %s120 = sadd.s32 %s119, 1
      %p123 = scmp.eq.s32.totalorder %s24, 1
      %p124 = scmp.ne.s32.totalorder %s119, %s121
      %p125 = scmp.eq.s32.totalorder %s24, 0
      %p126 = por %p124, %p125
      %p127 = scmp.ne.s32.totalorder %s119, %s121
      %p128 = scmp.eq.s32.totalorder %s29, 1
      %p129 = por %p127, %p128
      %p130 = scmp.ne.s32.totalorder %s121, %s122
      %p131 = scmp.eq.s32.totalorder %s29, 0
      %p132 = por %p130, %p131
      %p133 = scmp.ne.s32.totalorder %s121, %s122
      %p134 = scmp.eq.s32.totalorder %s30, 1
      %p135 = por %p133, %p134
      %p137 = scmp.ne.s32.totalorder %s122, %s136
      %p138 = scmp.eq.s32.totalorder %s30, 0
      %p139 = por %p137, %p138
      %s141 = sadd.s32 %s140, 1
      %p144 = scmp.eq.s32.totalorder %s24, 1
      %p145 = scmp.ne.s32.totalorder %s140, %s142
      %p146 = scmp.eq.s32.totalorder %s24, 0
      %p147 = por %p145, %p146
      %p148 = scmp.ne.s32.totalorder %s140, %s142
      %p149 = scmp.eq.s32.totalorder %s29, 1
      %p150 = por %p148, %p149
      %p151 = scmp.ne.s32.totalorder %s142, %s143
      %p152 = scmp.eq.s32.totalorder %s29, 0
      %p153 = por %p151, %p152
      %p154 = scmp.ne.s32.totalorder %s142, %s143
      %p155 = scmp.eq.s32.totalorder %s30, 1
      %p156 = por %p154, %p155
      %p158 = scmp.ne.s32.totalorder %s143, %s157
      %p159 = scmp.eq.s32.totalorder %s30, 0
      %p160 = por %p158, %p159
      %s162 = sadd.s32 %s161, 1
      %p165 = scmp.eq.s32.totalorder %s24, 1
      %p166 = scmp.ne.s32.totalorder %s161, %s163
      %p167 = scmp.eq.s32.totalorder %s24, 0
      %p168 = por %p166, %p167
      %p169 = scmp.ne.s32.totalorder %s161, %s163
      %p170 = scmp.eq.s32.totalorder %s29, 1
      %p171 = por %p169, %p170
      %p172 = scmp.ne.s32.totalorder %s163, %s164
      %p173 = scmp.eq.s32.totalorder %s29, 0
      %p174 = por %p172, %p173
      %p175 = scmp.ne.s32.totalorder %s163, %s164
      %p176 = scmp.eq.s32.totalorder %s30, 1
      %p177 = por %p175, %p176
      %p179 = scmp.ne.s32.totalorder %s164, %s178
      %p180 = scmp.eq.s32.totalorder %s30, 0
      %p181 = por %p179, %p180
      %s183 = sadd.s32 %s182, 1
      %p186 = scmp.eq.s32.totalorder %s24, 1
      %p187 = scmp.ne.s32.totalorder %s182, %s184
      %p188 = scmp.eq.s32.totalorder %s24, 0
      %p189 = por %p187, %p188
      %p190 = scmp.ne.s32.totalorder %s182, %s184
      %p191 = scmp.eq.s32.totalorder %s29, 1
      %p192 = por %p190, %p191
      %p193 = scmp.ne.s32.totalorder %s184, %s185
      %p194 = scmp.eq.s32.totalorder %s29, 0
      %p195 = por %p193, %p194
      %p196 = scmp.ne.s32.totalorder %s184, %s185
      %p197 = scmp.eq.s32.totalorder %s30, 1
      %p198 = por %p196, %p197
      %p200 = scmp.ne.s32.totalorder %s185, %s199
      %p201 = scmp.eq.s32.totalorder %s30, 0
      %p202 = por %p200, %p201
      %s204 = sadd.s32 %s203, 1
      %p207 = scmp.eq.s32.totalorder %s24, 1
      %p208 = scmp.ne.s32.totalorder %s203, %s205
      %p209 = scmp.eq.s32.totalorder %s24, 0
      %p210 = por %p208, %p209
      %p211 = scmp.ne.s32.totalorder %s203, %s205
      %p212 = scmp.eq.s32.totalorder %s29, 1
      %p213 = por %p211, %p212
      %p214 = scmp.ne.s32.totalorder %s205, %s206
      %p215 = scmp.eq.s32.totalorder %s29, 0
      %p216 = por %p214, %p215
      %p217 = scmp.ne.s32.totalorder %s205, %s206
      %p218 = scmp.eq.s32.totalorder %s30, 1
      %p219 = por %p217, %p218
      %p221 = scmp.ne.s32.totalorder %s206, %s220
      %p222 = scmp.eq.s32.totalorder %s30, 0
      %p223 = por %p221, %p222
      %s224 = ssub.s32 %s31, %s43
      %s225 = ssub.s32 %s32, %s39
      %s226 = sor.u32 %s224, %s225
      %p227 = scmp.eq.s32.totalorder %s226, 0
      %s229 = sadd.s32 %s228, 1
      %s230 = scalar_select %p227, %s228, %s229
      %p233 = pneg %p227
      %p234 = scmp.eq.s32.totalorder %s24, 1
      %p235 = por %p233, %p234
      %p236 = scmp.ne.s32.totalorder %s228, %s231
      %p237 = scmp.eq.s32.totalorder %s24, 0
      %p238 = por %p236, %p237
      %p239 = scmp.ne.s32.totalorder %s228, %s231
      %p240 = scmp.eq.s32.totalorder %s29, 1
      %p241 = por %p239, %p240
      %p242 = scmp.ne.s32.totalorder %s231, %s232
      %p243 = scmp.eq.s32.totalorder %s29, 0
      %p244 = por %p242, %p243
      %p245 = scmp.ne.s32.totalorder %s231, %s232
      %p246 = scmp.eq.s32.totalorder %s30, 1
      %p247 = por %p245, %p246
      %p249 = scmp.ne.s32.totalorder %s232, %s248
      %p250 = scmp.eq.s32.totalorder %s30, 0
      %p251 = por %p249, %p250
      %p252 = scmp.le.s32.totalorder 1, %s24
      %p253 = scmp.lt.s32.totalorder %s24, 3
      %p254 = pnand %p252, %p253
      %p255 = pneg %p254
      // Predicated region
      $region9: #{tpu_custom_call.1} parent=5 // pred_check
        _
      $region10: #{tpu_custom_call.1} parent=5 // pred_check_branch
        %257 = sbr.rel (%p254) target = $region12
      $region11: #{tpu_custom_call.1} parent=5 // pred_region
        %s258 = ssub.s32 %s24, 1
        // Predicated region
        $region13: #{tpu_custom_call.1} parent=11 // pred_check
          %p259 = pneg %p111
        $region14: #{tpu_custom_call.1} parent=11 // pred_check_branch
          %261 = sbr.rel (%p259) target = $region16
        $region15: #{tpu_custom_call.1} parent=11 // pred_region
          %s263 = ssub.s32 512, 512
          %264 = vsyncadd [#allocation6], %s263
          %s265 = sshll.u32 [#allocation7], 4
          %s266 = int_to_ptr.vmem [resolvable:$true] %s265
          %271 = dma.hbm_to_vmem [thread:$0]  %s2, 512, %s266, [#allocation6], 64, 64, 4
        $region16: #{tpu_custom_call.1} parent=11 // pred_fallthru
          _
        // Predicated region
        $region17: #{tpu_custom_call.1} parent=11 // pred_check
          %p272 = pneg %p132
        $region18: #{tpu_custom_call.1} parent=11 // pred_check_branch
          %274 = sbr.rel (%p272) target = $region20
        $region19: #{tpu_custom_call.1} parent=11 // pred_region
          _
        $region20: #{tpu_custom_call.1} parent=11 // pred_fallthru
          _
        // Predicated region
        $region21: #{tpu_custom_call.1} parent=11 // pred_check
          %p275 = pneg %p153
        $region22: #{tpu_custom_call.1} parent=11 // pred_check_branch
          %277 = sbr.rel (%p275) target = $region24
        $region23: #{tpu_custom_call.1} parent=11 // pred_region
          %s279 = ssub.s32 512, 512
          %280 = vsyncadd [#allocation9], %s279
          %s281 = sshll.u32 [#allocation8], 4
          %s282 = int_to_ptr.vmem [resolvable:$true] %s281
          %287 = dma.hbm_to_vmem [thread:$0]  %s4, 512, %s282, [#allocation9], 64, 64, 4
        $region24: #{tpu_custom_call.1} parent=11 // pred_fallthru
          _
        // Predicated region
        $region25: #{tpu_custom_call.1} parent=11 // pred_check
          %p288 = pneg %p174
        $region26: #{tpu_custom_call.1} parent=11 // pred_check_branch
          %290 = sbr.rel (%p288) target = $region28
        $region27: #{tpu_custom_call.1} parent=11 // pred_region
          _
        $region28: #{tpu_custom_call.1} parent=11 // pred_fallthru
          _
        // Predicated region
        $region29: #{tpu_custom_call.1} parent=11 // pred_check
          %p291 = pneg %p195
        $region30: #{tpu_custom_call.1} parent=11 // pred_check_branch
          %293 = sbr.rel (%p291) target = $region32
        $region31: #{tpu_custom_call.1} parent=11 // pred_region
          %s295 = ssub.s32 1024, 1024
          %296 = vsyncadd [#allocation9], %s295
          %s297 = sshll.u32 [#allocation10], 4
          %s298 = int_to_ptr.vmem [resolvable:$true] %s297
          %303 = dma.hbm_to_vmem [thread:$0]  %s6, 1024, %s298, [#allocation9], 128, 128, 8
        $region32: #{tpu_custom_call.1} parent=11 // pred_fallthru
          _
        // Predicated region
        $region33: #{tpu_custom_call.1} parent=11 // pred_check
          %p304 = pneg %p216
        $region34: #{tpu_custom_call.1} parent=11 // pred_check_branch
          %306 = sbr.rel (%p304) target = $region36
        $region35: #{tpu_custom_call.1} parent=11 // pred_region
          _
        $region36: #{tpu_custom_call.1} parent=11 // pred_fallthru
          _
      $region12: #{tpu_custom_call.1} parent=5 // pred_fallthru
        _
      %p307 = scmp.lt.s32.totalorder %s24, 2
      // Predicated region
      $region37: #{tpu_custom_call.1} parent=5 // pred_check
        %p308 = pneg %p307
      $region38: #{tpu_custom_call.1} parent=5 // pred_check_branch
        %310 = sbr.rel (%p308) target = $region40
      $region39: #{tpu_custom_call.1} parent=5 // pred_region
        // Predicated region
        $region41: #{tpu_custom_call.1} parent=39 // pred_check
          %p311 = pneg %p58
        $region42: #{tpu_custom_call.1} parent=39 // pred_check_branch
          %313 = sbr.rel (%p311) target = $region44
        $region43: #{tpu_custom_call.1} parent=39 // pred_region
          %s314 = sand.u32 %s48, 1
          %s315 = scalar_lea.sflag [#allocation3], %s314
          %s316 = sand.u32 %s48, 1
          %s317 = smul.addr %s316, 48
          %s318 = scalar_lea.vmem [#allocation2], %s317
          %s319 = smul.u32 6, %s32
          %s321 = ssub.s32 768, 768
          %322 = vsyncadd %s315, %s321
          %s323 = smul.addr %s31, 6
          %s324 = sadd.s32 %s319, %s323
          %s325 = smul.addr %s324, 128
          %s326 = scalar_lea.hbm %s0, %s325
          %s327 = sshll.u32 %s318, 4
          %s328 = int_to_ptr.vmem [resolvable:$true] %s327
          %333 = dma.hbm_to_vmem [thread:$0]  %s326, 768, %s328, %s315, 128, 128, 8
        $region44: #{tpu_custom_call.1} parent=39 // pred_fallthru
          _
        // Predicated region
        $region45: #{tpu_custom_call.1} parent=39 // pred_check
          %p334 = pneg %p84
        $region46: #{tpu_custom_call.1} parent=39 // pred_check_branch
          %336 = sbr.rel (%p334) target = $region48
        $region47: #{tpu_custom_call.1} parent=39 // pred_region
          %s337 = sand.u32 %s24, 1
          %s338 = scalar_lea.sflag [#allocation6], %s337
          %s339 = sand.u32 %s74, 1
          %s340 = smul.addr %s339, 24
          %s341 = scalar_lea.vmem [#allocation5], %s340
          %s343 = ssub.s32 384, 384
          %344 = vsyncadd %s338, %s343
          %s345 = smul.addr %s31, 6
          %s346 = smul.addr %s345, 64
          %s347 = scalar_lea.hbm %s1, %s346
          %s348 = sshll.u32 %s341, 4
          %s349 = int_to_ptr.vmem [resolvable:$true] %s348
          %354 = dma.hbm_to_vmem [thread:$0]  %s347, 384, %s349, %s338, 64, 64, 4
        $region48: #{tpu_custom_call.1} parent=39 // pred_fallthru
          _
      $region40: #{tpu_custom_call.1} parent=5 // pred_fallthru
        _
      %p355 = scmp.le.s32.totalorder 1, %s24
      %p356 = scmp.lt.s32.totalorder %s24, 3
      %p357 = pnand %p355, %p356
      %p358 = pneg %p357
      // Predicated region
      $region49: #{tpu_custom_call.1} parent=5 // pred_check
        _
      $region50: #{tpu_custom_call.1} parent=5 // pred_check_branch
        %360 = sbr.rel (%p357) target = $region52
      $region51: #{tpu_custom_call.1} parent=5 // pred_region
        %s361 = ssub.s32 %s24, 1
        %s362 = sand.u32 %s51, 1
        %s363 = scalar_lea.sflag [#allocation3], %s362
        %s364 = sand.u32 %s51, 1
        %s365 = smul.addr %s364, 48
        %s366 = scalar_lea.vmem [#allocation2], %s365
        // Predicated region
        $region53: #{tpu_custom_call.1} parent=51 // pred_check
          %p367 = pneg %p64
        $region54: #{tpu_custom_call.1} parent=51 // pred_check_branch
          %369 = sbr.rel (%p367) target = $region56
        $region55: #{tpu_custom_call.1} parent=51 // pred_region
          %370 = dma.done %s363, 768
        $region56: #{tpu_custom_call.1} parent=51 // pred_fallthru
          _
        %s371 = sand.u32 %s29, 1
        %s372 = scalar_lea.sflag [#allocation6], %s371
        %s373 = sand.u32 %s77, 1
        %s374 = smul.addr %s373, 24
        %s375 = scalar_lea.vmem [#allocation5], %s374
        // Predicated region
        $region57: #{tpu_custom_call.1} parent=51 // pred_check
          %p376 = pneg %p90
        $region58: #{tpu_custom_call.1} parent=51 // pred_check_branch
          %378 = sbr.rel (%p376) target = $region60
        $region59: #{tpu_custom_call.1} parent=51 // pred_region
          %379 = dma.done %s372, 384
        $region60: #{tpu_custom_call.1} parent=51 // pred_fallthru
          _
        // Predicated region
        $region61: #{tpu_custom_call.1} parent=51 // pred_check
          %p380 = pneg %p111
        $region62: #{tpu_custom_call.1} parent=51 // pred_check_branch
          %382 = sbr.rel (%p380) target = $region64
        $region63: #{tpu_custom_call.1} parent=51 // pred_region
          %383 = dma.done [#allocation6], 512
        $region64: #{tpu_custom_call.1} parent=51 // pred_fallthru
          _
        // Predicated region
        $region65: #{tpu_custom_call.1} parent=51 // pred_check
          %p384 = pneg %p153
        $region66: #{tpu_custom_call.1} parent=51 // pred_check_branch
          %386 = sbr.rel (%p384) target = $region68
        $region67: #{tpu_custom_call.1} parent=51 // pred_region
          %387 = dma.done [#allocation9], 512
        $region68: #{tpu_custom_call.1} parent=51 // pred_fallthru
          _
        // Predicated region
        $region69: #{tpu_custom_call.1} parent=51 // pred_check
          %p388 = pneg %p195
        $region70: #{tpu_custom_call.1} parent=51 // pred_check_branch
          %390 = sbr.rel (%p388) target = $region72
        $region71: #{tpu_custom_call.1} parent=51 // pred_region
          %391 = dma.done [#allocation9], 1024
        $region72: #{tpu_custom_call.1} parent=51 // pred_fallthru
          _
        %s392 = sand.u32 %s51, 1
        %s393 = scalar_lea.sflag [#allocation3], %s392
        %s394 = sand.u32 %s51, 1
        %s395 = smul.addr %s394, 48
        %s396 = scalar_lea.vmem [#allocation2], %s395
        %p397 = pneg %p64
        %p398 = pneg %p61
        %s399 = sand.u32 %s29, 1
        %s400 = scalar_lea.sflag [#allocation6], %s399
        %s401 = sand.u32 %s77, 1
        %s402 = smul.addr %s401, 24
        %s403 = scalar_lea.vmem [#allocation5], %s402
        %p404 = pneg %p90
        %p405 = pneg %p87
        %p406 = pneg %p111
        %p407 = pneg %p108
        %p408 = pneg %p132
        %p409 = pneg %p129
        %p410 = pneg %p153
        %p411 = pneg %p150
        %p412 = pneg %p174
        %p413 = pneg %p171
        %p414 = pneg %p195
        %p415 = pneg %p192
        %p416 = pneg %p216
        %p417 = pneg %p213
        %p418 = pneg %p244
        %p419 = pneg %p241
        %s420 = sand.u32 %s231, 1
        %s421 = scalar_lea.sflag [#allocation4], %s420
        %s422 = sand.u32 %s231, 1
        %s423 = smul.addr %s422, 48
        %s424 = scalar_lea.vmem [#allocation11], %s423
        %s425 = smul.u32 6, %s34
        %s426 = smul.u32 6, %s34
        %v428 = vld [vmem:[%s366] sm:$0xff]
        %v429 = vld [vmem:[%s366 + $0x8] sm:$0xff]
        %v430 = vld [vmem:[%s366 + $0x10] sm:$0xff]
        %v431 = vld [vmem:[%s366 + $0x18] sm:$0xff]
        %v432 = vld [vmem:[%s366 + $0x20] sm:$0xff]
        %v433 = vld [vmem:[%s366 + $0x28] sm:$0xff]
        %v434 = vld [vmem:[%s375] sm:$0xf]
        %v435 = vld [vmem:[%s375 + $0x4] sm:$0xf]
        %v436 = vld [vmem:[%s375 + $0x8] sm:$0xf]
        %v437 = vld [vmem:[%s375 + $0xc] sm:$0xf]
        %v438 = vld [vmem:[%s375 + $0x10] sm:$0xf]
        %v439 = vld [vmem:[%s375 + $0x14] sm:$0xf]
        %v440 = vld [vmem:[#allocation10] sm:$0xff]
        %v441 = vld [vmem:[#allocation10 + $0x8] sm:$0xff]
        %v442 = vld [vmem:[#allocation10 + $0x10] sm:$0xff]
        %v443 = vld [vmem:[#allocation10 + $0x18] sm:$0xff]
        %v444 = vld [vmem:[#allocation10 + $0x20] sm:$0xff]
        %v445 = vld [vmem:[#allocation10 + $0x28] sm:$0xff]
        %v446 = vld [vmem:[#allocation10 + $0x30] sm:$0xff]
        %v447 = vld [vmem:[#allocation10 + $0x38] sm:$0xff]
        %v448 = vld [vmem:[%s7] sm:$0x3]
        %v450 = vlaneseq
        %v451 = vshrl.u32 %v450, 7
        %v452 = vsub.s32 0, %v451
        %v453 = vrot.slane %v448, %v452
        %v454 = vlaneseq
        %v455 = vshrl.u32 %v454, 7
        %v456 = vsub.s32 1, %v455
        %v457 = vrot.slane %v448, %v456
        %v466 = vunpack.c.l.b16 %v434
        %v467 = vunpack.c.l.b16 %v435
        %v468 = vunpack.c.l.b16 %v436
        %v469 = vunpack.c.l.b16 %v437
        %v470 = vunpack.c.l.b16 %v438
        %v471 = vunpack.c.l.b16 %v439
        %v472 = vpack.c.b16 %v467, %v466
        %v473 = vpack.c.b16 %v469, %v468
        %v474 = vpack.c.b16 %v471, %v470
        %v483 = vunpack.c.l.b16 %v440
        %v484 = vunpack.c.h.b16 %v440
        %v485 = vunpack.c.l.b16 %v441
        %v486 = vunpack.c.h.b16 %v441
        %v487 = vunpack.c.l.b16 %v442
        %v488 = vunpack.c.h.b16 %v442
        %v489 = vunpack.c.l.b16 %v443
        %v490 = vunpack.c.h.b16 %v443
        %v491 = vunpack.c.l.b16 %v444
        %v492 = vunpack.c.h.b16 %v444
        %v493 = vunpack.c.l.b16 %v445
        %v494 = vunpack.c.h.b16 %v445
        %v495 = vunpack.c.l.b16 %v446
        %v496 = vunpack.c.h.b16 %v446
        %v497 = vunpack.c.l.b16 %v447
        %v498 = vunpack.c.h.b16 %v447
        %v499 = vpack.c.b16 %v485, %v483
        %v500 = vpack.c.b16 %v486, %v484
        %v501 = vpack.c.b16 %v489, %v487
        %v502 = vpack.c.b16 %v490, %v488
        %v503 = vpack.c.b16 %v493, %v491
        %v504 = vpack.c.b16 %v494, %v492
        %v505 = vpack.c.b16 %v497, %v495
        %v506 = vpack.c.b16 %v498, %v496
        %vm515 = vcmask 523264
        %v517 = vsel %vm515, %v472, 0
        %v520 = vsel %vm515, %v473, 0
        %v523 = vsel %vm515, %v474, 0
        %525 = vmatprep.subr.bf16.mxu0 %v500
        %526 = vmatpush1.bf16.msra.mxu0 %v499
        %527 = vmatprep.subr.bf16.mxu0 %v502
        %528 = vmatpush1.bf16.msra.mxu0 %v501
        %529 = vmatprep.subr.bf16.mxu0 %v504
        %530 = vmatpush1.bf16.msra.mxu0 %v503
        %531 = vmatprep.subr.bf16.mxu0 %v506
        %532 = vmatpush1.bf16.msra.mxu0 %v505
        %533 = vmatprep.subr.bf16.mxu0 0
        %534 = vmatpush1.bf16.msra.mxu0 0
        %535 = vmatprep.subr.bf16.mxu0 0
        %536 = vmatpush1.bf16.msra.mxu0 0
        %537 = vmatprep.subr.bf16.mxu0 0
        %538 = vmatpush1.bf16.msra.mxu0 0
        %539 = vmatprep.subr.bf16.mxu0 0
        %540 = vmatpush1.bf16.msra.mxu0 0
        %541 = vmatprep.subr.bf16.mxu0 0
        %542 = vmatpush1.bf16.msra.mxu0 0
        %543 = vmatprep.subr.bf16.mxu0 0
        %544 = vmatpush1.bf16.msra.mxu0 0
        %545 = vmatprep.subr.bf16.mxu0 0
        %546 = vmatpush1.bf16.msra.mxu0 0
        %547 = vmatprep.subr.bf16.mxu0 0
        %548 = vmatpush1.bf16.msra.mxu0 0
        %549 = vmatprep.subr.bf16.mxu0 0
        %550 = vmatpush1.bf16.msra.mxu0 0
        %551 = vmatprep.subr.bf16.mxu0 0
        %552 = vmatpush1.bf16.msra.mxu0 0
        %553 = vmatprep.subr.bf16.mxu0 0
        %554 = vmatpush1.bf16.msra.mxu0 0
        %555 = vmatprep.subr.bf16.mxu0 0
        %556 = vmatpush1.bf16.msra.mxu0 0
        %557 = vmatprep.mubr.bf16.mxu0 0
        %558 = vmatmul.mubr.bf16.gmra.mrb[0].mxu0 %v517
        %v559 = vpop.f32.mrb[0].mxu0
        %v560 = vadd.f32 %v453, %v559
        %v561 = vpop.f32.mrb[0].mxu0
        %v562 = vadd.f32 %v457, %v561
        %v563 = vpop.f32.mrb[0].mxu0
        %v564 = vadd.f32 %v453, %v563
        %v565 = vpop.f32.mrb[0].mxu0
        %v566 = vadd.f32 %v457, %v565
        %567 = vmatprep.mubr.bf16.mxu0 0
        %568 = vmatmul.mubr.bf16.gmra.mrb[0].mxu0 %v520
        %v569 = vpop.f32.mrb[0].mxu0
        %v570 = vadd.f32 %v453, %v569
        %v571 = vpop.f32.mrb[0].mxu0
        %v572 = vadd.f32 %v457, %v571
        %v573 = vpop.f32.mrb[0].mxu0
        %v574 = vadd.f32 %v453, %v573
        %v575 = vpop.f32.mrb[0].mxu0
        %v576 = vadd.f32 %v457, %v575
        %577 = vmatprep.mubr.bf16.mxu0 0
        %578 = vmatmul.mubr.bf16.gmra.mrb[0].mxu0 %v523
        %v579 = vpop.f32.mrb[0].mxu0
        %v580 = vadd.f32 %v453, %v579
        %v581 = vpop.f32.mrb[0].mxu0
        %v582 = vadd.f32 %v457, %v581
        %v583 = vpop.f32.mrb[0].mxu0
        %v584 = vadd.f32 %v453, %v583
        %v585 = vpop.f32.mrb[0].mxu0
        %v586 = vadd.f32 %v457, %v585
        %587 = vdwg.mxu0
        %v588 = vpack.c.bf16 %v429, %v428
        %v589 = vpack.c.bf16 %v431, %v430
        %v590 = vpack.c.bf16 %v433, %v432
        %v591 = vld [vmem:[#allocation7] sm:$0xf]
        %v592 = vld [vmem:[#allocation7 + $0x4] sm:$0xf]
        %v593 = vld [vmem:[#allocation7 + $0x8] sm:$0xf]
        %v594 = vld [vmem:[#allocation7 + $0xc] sm:$0xf]
        %v595 = vld [vmem:[#allocation7 + $0x10] sm:$0xf]
        %v596 = vld [vmem:[#allocation7 + $0x14] sm:$0xf]
        %v597 = vld [vmem:[#allocation7 + $0x18] sm:$0xf]
        %v598 = vld [vmem:[#allocation7 + $0x1c] sm:$0xf]
        %v599 = vld [vmem:[%s3] sm:$0x1]
        %v601 = vlaneseq
        %v602 = vshrl.u32 %v601, 7
        %v603 = vsub.s32 0, %v602
        %v604 = vrot.slane %v599, %v603
        %v614 = vunpack.c.l.b16 %v591
        %v615 = vunpack.c.l.b16 %v592
        %v616 = vunpack.c.l.b16 %v593
        %v617 = vunpack.c.l.b16 %v594
        %v618 = vunpack.c.l.b16 %v595
        %v619 = vunpack.c.l.b16 %v596
        %v620 = vunpack.c.l.b16 %v597
        %v621 = vunpack.c.l.b16 %v598
        %v622 = vpack.c.b16 %v615, %v614
        %v623 = vpack.c.b16 %v617, %v616
        %v624 = vpack.c.b16 %v619, %v618
        %v625 = vpack.c.b16 %v621, %v620
        %v631 = vsel %vm515, %v588, 0
        %v634 = vsel %vm515, %v589, 0
        %v637 = vsel %vm515, %v590, 0
        %639 = vmatprep.subr.bf16.mxu0 0
        %640 = vmatpush1.bf16.msra.mxu0 %v622
        %641 = vmatprep.subr.bf16.mxu0 0
        %642 = vmatpush1.bf16.msra.mxu0 %v623
        %643 = vmatprep.subr.bf16.mxu0 0
        %644 = vmatpush1.bf16.msra.mxu0 %v624
        %645 = vmatprep.subr.bf16.mxu0 0
        %646 = vmatpush1.bf16.msra.mxu0 %v625
        %647 = vmatprep.subr.bf16.mxu0 0
        %648 = vmatpush1.bf16.msra.mxu0 0
        %649 = vmatprep.subr.bf16.mxu0 0
        %650 = vmatpush1.bf16.msra.mxu0 0
        %651 = vmatprep.subr.bf16.mxu0 0
        %652 = vmatpush1.bf16.msra.mxu0 0
        %653 = vmatprep.subr.bf16.mxu0 0
        %654 = vmatpush1.bf16.msra.mxu0 0
        %655 = vmatprep.subr.bf16.mxu0 0
        %656 = vmatpush1.bf16.msra.mxu0 0
        %657 = vmatprep.subr.bf16.mxu0 0
        %658 = vmatpush1.bf16.msra.mxu0 0
        %659 = vmatprep.subr.bf16.mxu0 0
        %660 = vmatpush1.bf16.msra.mxu0 0
        %661 = vmatprep.subr.bf16.mxu0 0
        %662 = vmatpush1.bf16.msra.mxu0 0
        %663 = vmatprep.subr.bf16.mxu0 0
        %664 = vmatpush1.bf16.msra.mxu0 0
        %665 = vmatprep.subr.bf16.mxu0 0
        %666 = vmatpush1.bf16.msra.mxu0 0
        %667 = vmatprep.subr.bf16.mxu0 0
        %668 = vmatpush1.bf16.msra.mxu0 0
        %669 = vmatprep.subr.bf16.mxu0 0
        %670 = vmatpush1.bf16.msra.mxu0 0
        %671 = vmatprep.mubr.bf16.mxu0 0
        %672 = vmatmul.mubr.bf16.gmra.mrb[0].mxu0 %v631
        %v673 = vpop.f32.mrb[0].mxu0
        %v674 = vadd.f32 %v604, %v673
        %v675 = vpop.f32.mrb[0].mxu0
        %v676 = vpop.f32.mrb[0].mxu0
        %v677 = vadd.f32 %v604, %v676
        %v678 = vpop.f32.mrb[0].mxu0
        %679 = vmatprep.mubr.bf16.mxu0 0
        %680 = vmatmul.mubr.bf16.gmra.mrb[0].mxu0 %v634
        %v681 = vpop.f32.mrb[0].mxu0
        %v682 = vadd.f32 %v604, %v681
        %v683 = vpop.f32.mrb[0].mxu0
        %v684 = vpop.f32.mrb[0].mxu0
        %v685 = vadd.f32 %v604, %v684
        %v686 = vpop.f32.mrb[0].mxu0
        %687 = vmatprep.mubr.bf16.mxu0 0
        %688 = vmatmul.mubr.bf16.gmra.mrb[0].mxu0 %v637
        %v689 = vpop.f32.mrb[0].mxu0
        %v690 = vadd.f32 %v604, %v689
        %v691 = vpop.f32.mrb[0].mxu0
        %v692 = vpop.f32.mrb[0].mxu0
        %v693 = vadd.f32 %v604, %v692
        %v694 = vpop.f32.mrb[0].mxu0
        %695 = vdwg.mxu0
        %v696 = vmul.f32 %v560, %v674
        %v697 = vmul.f32 %v564, %v677
        %v698 = vmul.f32 %v570, %v682
        %v699 = vmul.f32 %v574, %v685
        %v700 = vmul.f32 %v580, %v690
        %v701 = vmul.f32 %v584, %v693
        %708 = vrot.lane.b32.xlu0 %v560, 64
        %v709 = vpop.permute.xlu0 %708
        %710 = vrot.lane.b32.xlu0 %v564, 64
        %v711 = vpop.permute.xlu0 %710
        %712 = vrot.lane.b32.xlu0 %v570, 64
        %v713 = vpop.permute.xlu0 %712
        %714 = vrot.lane.b32.xlu0 %v574, 64
        %v715 = vpop.permute.xlu0 %714
        %716 = vrot.lane.b32.xlu0 %v580, 64
        %v717 = vpop.permute.xlu0 %716
        %718 = vrot.lane.b32.xlu0 %v584, 64
        %v719 = vpop.permute.xlu0 %718
        %v726 = vadd.f32 %v696, %v709
        %v727 = vadd.f32 %v697, %v711
        %v728 = vadd.f32 %v698, %v713
        %v729 = vadd.f32 %v699, %v715
        %v730 = vadd.f32 %v700, %v717
        %v731 = vadd.f32 %v701, %v719
        %v732 = vxor.u32 %v726, 2147483648
        %v733 = vxor.u32 %v727, 2147483648
        %v734 = vxor.u32 %v728, 2147483648
        %v735 = vxor.u32 %v729, 2147483648
        %v736 = vxor.u32 %v730, 2147483648
        %v737 = vxor.u32 %v731, 2147483648
        %v738 = vmul.f32 %v732, 1.442695
        %v739 = vpow.pop %v738
        %v740 = vmul.f32 %v733, 1.442695
        %v741 = vpow.pop %v740
        %v742 = vmul.f32 %v734, 1.442695
        %v743 = vpow.pop %v742
        %v744 = vmul.f32 %v735, 1.442695
        %v745 = vpow.pop %v744
        %v746 = vmul.f32 %v736, 1.442695
        %v747 = vpow.pop %v746
        %v748 = vmul.f32 %v737, 1.442695
        %v749 = vpow.pop %v748
        %v750 = vadd.f32 %v739, 1.0
        %v751 = vadd.f32 %v741, 1.0
        %v752 = vadd.f32 %v743, 1.0
        %v753 = vadd.f32 %v745, 1.0
        %v754 = vadd.f32 %v747, 1.0
        %v755 = vadd.f32 %v749, 1.0
        %v756 = vrcp.pop %v750
        %v757 = vmul.f32 1.0, %v756
        %v758 = vrcp.pop %v751
        %v759 = vmul.f32 1.0, %v758
        %v760 = vrcp.pop %v752
        %v761 = vmul.f32 1.0, %v760
        %v762 = vrcp.pop %v753
        %v763 = vmul.f32 1.0, %v762
        %v764 = vrcp.pop %v754
        %v765 = vmul.f32 1.0, %v764
        %v766 = vrcp.pop %v755
        %v767 = vmul.f32 1.0, %v766
        %v768 = vmul.f32 %v726, %v757
        %v769 = vmul.f32 %v727, %v759
        %v770 = vmul.f32 %v728, %v761
        %v771 = vmul.f32 %v729, %v763
        %v772 = vmul.f32 %v730, %v765
        %v773 = vmul.f32 %v731, %v767
        %v774 = vpack.c.bf16 %v769, %v768
        %v775 = vpack.c.bf16 %v771, %v770
        %v776 = vpack.c.bf16 %v773, %v772
        %v777 = vld [vmem:[#allocation8] sm:$0xf]
        %v778 = vld [vmem:[#allocation8 + $0x4] sm:$0xf]
        %v779 = vld [vmem:[#allocation8 + $0x8] sm:$0xf]
        %v780 = vld [vmem:[#allocation8 + $0xc] sm:$0xf]
        %v781 = vld [vmem:[#allocation8 + $0x10] sm:$0xf]
        %v782 = vld [vmem:[#allocation8 + $0x14] sm:$0xf]
        %v783 = vld [vmem:[#allocation8 + $0x18] sm:$0xf]
        %v784 = vld [vmem:[#allocation8 + $0x1c] sm:$0xf]
        %v785 = vld [vmem:[%s5] sm:$0x1]
        %v787 = vlaneseq
        %v788 = vshrl.u32 %v787, 7
        %v789 = vsub.s32 0, %v788
        %v790 = vrot.slane %v785, %v789
        %v800 = vunpack.c.l.b16 %v777
        %v801 = vunpack.c.l.b16 %v778
        %v802 = vunpack.c.l.b16 %v779
        %v803 = vunpack.c.l.b16 %v780
        %v804 = vunpack.c.l.b16 %v781
        %v805 = vunpack.c.l.b16 %v782
        %v806 = vunpack.c.l.b16 %v783
        %v807 = vunpack.c.l.b16 %v784
        %v808 = vpack.c.b16 %v801, %v800
        %v809 = vpack.c.b16 %v803, %v802
        %v810 = vpack.c.b16 %v805, %v804
        %v811 = vpack.c.b16 %v807, %v806
        %v817 = vsel %vm515, %v774, 0
        %v820 = vsel %vm515, %v775, 0
        %v823 = vsel %vm515, %v776, 0
        %825 = vmatprep.subr.bf16.mxu0 0
        %826 = vmatpush1.bf16.msra.mxu0 %v808
        %827 = vmatprep.subr.bf16.mxu0 0
        %828 = vmatpush1.bf16.msra.mxu0 %v809
        %829 = vmatprep.subr.bf16.mxu0 0
        %830 = vmatpush1.bf16.msra.mxu0 %v810
        %831 = vmatprep.subr.bf16.mxu0 0
        %832 = vmatpush1.bf16.msra.mxu0 %v811
        %833 = vmatprep.subr.bf16.mxu0 0
        %834 = vmatpush1.bf16.msra.mxu0 0
        %835 = vmatprep.subr.bf16.mxu0 0
        %836 = vmatpush1.bf16.msra.mxu0 0
        %837 = vmatprep.subr.bf16.mxu0 0
        %838 = vmatpush1.bf16.msra.mxu0 0
        %839 = vmatprep.subr.bf16.mxu0 0
        %840 = vmatpush1.bf16.msra.mxu0 0
        %841 = vmatprep.subr.bf16.mxu0 0
        %842 = vmatpush1.bf16.msra.mxu0 0
        %843 = vmatprep.subr.bf16.mxu0 0
        %844 = vmatpush1.bf16.msra.mxu0 0
        %845 = vmatprep.subr.bf16.mxu0 0
        %846 = vmatpush1.bf16.msra.mxu0 0
        %847 = vmatprep.subr.bf16.mxu0 0
        %848 = vmatpush1.bf16.msra.mxu0 0
        %849 = vmatprep.subr.bf16.mxu0 0
        %850 = vmatpush1.bf16.msra.mxu0 0
        %851 = vmatprep.subr.bf16.mxu0 0
        %852 = vmatpush1.bf16.msra.mxu0 0
        %853 = vmatprep.subr.bf16.mxu0 0
        %854 = vmatpush1.bf16.msra.mxu0 0
        %855 = vmatprep.subr.bf16.mxu0 0
        %856 = vmatpush1.bf16.msra.mxu0 0
        %857 = vmatprep.mubr.bf16.mxu0 0
        %858 = vmatmul.mubr.bf16.gmra.mrb[0].mxu0 %v817
        %v859 = vpop.f32.mrb[0].mxu0
        %v860 = vadd.f32 %v790, %v859
        %v861 = vpop.f32.mrb[0].mxu0
        %v862 = vpop.f32.mrb[0].mxu0
        %v863 = vadd.f32 %v790, %v862
        %v864 = vpop.f32.mrb[0].mxu0
        %865 = vmatprep.mubr.bf16.mxu0 0
        %866 = vmatmul.mubr.bf16.gmra.mrb[0].mxu0 %v820
        %v867 = vpop.f32.mrb[0].mxu0
        %v868 = vadd.f32 %v790, %v867
        %v869 = vpop.f32.mrb[0].mxu0
        %v870 = vpop.f32.mrb[0].mxu0
        %v871 = vadd.f32 %v790, %v870
        %v872 = vpop.f32.mrb[0].mxu0
        %873 = vmatprep.mubr.bf16.mxu0 0
        %874 = vmatmul.mubr.bf16.gmra.mrb[0].mxu0 %v823
        %v875 = vpop.f32.mrb[0].mxu0
        %v876 = vadd.f32 %v790, %v875
        %v877 = vpop.f32.mrb[0].mxu0
        %v878 = vpop.f32.mrb[0].mxu0
        %v879 = vadd.f32 %v790, %v878
        %v880 = vpop.f32.mrb[0].mxu0
        %881 = vdwg.mxu0
        %v882 = vmul.f32 %v562, %v860
        %v883 = vmul.f32 %v566, %v863
        %v884 = vmul.f32 %v572, %v868
        %v885 = vmul.f32 %v576, %v871
        %v886 = vmul.f32 %v582, %v876
        %v887 = vmul.f32 %v586, %v879
        %894 = vrot.lane.b32.xlu0 %v562, 64
        %v895 = vpop.permute.xlu0 %894
        %896 = vrot.lane.b32.xlu0 %v566, 64
        %v897 = vpop.permute.xlu0 %896
        %898 = vrot.lane.b32.xlu0 %v572, 64
        %v899 = vpop.permute.xlu0 %898
        %900 = vrot.lane.b32.xlu0 %v576, 64
        %v901 = vpop.permute.xlu0 %900
        %902 = vrot.lane.b32.xlu0 %v582, 64
        %v903 = vpop.permute.xlu0 %902
        %904 = vrot.lane.b32.xlu0 %v586, 64
        %v905 = vpop.permute.xlu0 %904
        %v912 = vadd.f32 %v882, %v895
        %v913 = vadd.f32 %v883, %v897
        %v914 = vadd.f32 %v884, %v899
        %v915 = vadd.f32 %v885, %v901
        %v916 = vadd.f32 %v886, %v903
        %v917 = vadd.f32 %v887, %v905
        %v918 = vxor.u32 %v912, 2147483648
        %v919 = vxor.u32 %v913, 2147483648
        %v920 = vxor.u32 %v914, 2147483648
        %v921 = vxor.u32 %v915, 2147483648
        %v922 = vxor.u32 %v916, 2147483648
        %v923 = vxor.u32 %v917, 2147483648
        %v924 = vmul.f32 %v918, 1.442695
        %v925 = vpow.pop %v924
        %v926 = vmul.f32 %v919, 1.442695
        %v927 = vpow.pop %v926
        %v928 = vmul.f32 %v920, 1.442695
        %v929 = vpow.pop %v928
        %v930 = vmul.f32 %v921, 1.442695
        %v931 = vpow.pop %v930
        %v932 = vmul.f32 %v922, 1.442695
        %v933 = vpow.pop %v932
        %v934 = vmul.f32 %v923, 1.442695
        %v935 = vpow.pop %v934
        %v936 = vadd.f32 %v925, 1.0
        %v937 = vadd.f32 %v927, 1.0
        %v938 = vadd.f32 %v929, 1.0
        %v939 = vadd.f32 %v931, 1.0
        %v940 = vadd.f32 %v933, 1.0
        %v941 = vadd.f32 %v935, 1.0
        %v942 = vrcp.pop %v936
        %v943 = vmul.f32 1.0, %v942
        %v944 = vrcp.pop %v937
        %v945 = vmul.f32 1.0, %v944
        %v946 = vrcp.pop %v938
        %v947 = vmul.f32 1.0, %v946
        %v948 = vrcp.pop %v939
        %v949 = vmul.f32 1.0, %v948
        %v950 = vrcp.pop %v940
        %v951 = vmul.f32 1.0, %v950
        %v952 = vrcp.pop %v941
        %v953 = vmul.f32 1.0, %v952
        %v954 = vmul.f32 %v912, %v943
        %v955 = vmul.f32 %v913, %v945
        %v956 = vmul.f32 %v914, %v947
        %v957 = vmul.f32 %v915, %v949
        %v958 = vmul.f32 %v916, %v951
        %v959 = vmul.f32 %v917, %v953
        %v960 = vadd.f32 %v428, %v954
        %v961 = vadd.f32 %v429, %v955
        %v962 = vadd.f32 %v430, %v956
        %v963 = vadd.f32 %v431, %v957
        %v964 = vadd.f32 %v432, %v958
        %v965 = vadd.f32 %v433, %v959
        %966 = vst.msk [vmem:[%s424] sm:$0xff] %vm515, %v960
        %967 = vst.msk [vmem:[%s424 + $0x8] sm:$0xff] %vm515, %v961
        %968 = vst.msk [vmem:[%s424 + $0x10] sm:$0xff] %vm515, %v962
        %969 = vst.msk [vmem:[%s424 + $0x18] sm:$0xff] %vm515, %v963
        %970 = vst.msk [vmem:[%s424 + $0x20] sm:$0xff] %vm515, %v964
        %971 = vst.msk [vmem:[%s424 + $0x28] sm:$0xff] %vm515, %v965
        %s972 = sand.u32 %s231, 1
        %s973 = scalar_lea.sflag [#allocation4], %s972
        %s974 = sand.u32 %s231, 1
        %s975 = smul.addr %s974, 48
        %s976 = scalar_lea.vmem [#allocation11], %s975
        // Predicated region
        $region73: #{tpu_custom_call.1} parent=51 // pred_check
          %p977 = pneg %p241
        $region74: #{tpu_custom_call.1} parent=51 // pred_check_branch
          %979 = sbr.rel (%p977) target = $region76
        $region75: #{tpu_custom_call.1} parent=51 // pred_region
          %s980 = smul.u32 6, %s34
          %s982 = ssub.s32 768, 768
          %983 = vsyncadd %s973, %s982
          %s984 = smul.addr %s33, 6
          %s985 = sadd.s32 %s980, %s984
          %s986 = smul.addr %s985, 128
          %s987 = scalar_lea.hbm %s8, %s986
          %s988 = sshll.u32 %s976, 4
          %s989 = int_to_ptr.vmem [resolvable:$true] %s988
          %994 = dma.vmem_to_hbm [thread:$0]  %s989, 768, %s987, %s973, 128, 128, 8
        $region76: #{tpu_custom_call.1} parent=51 // pred_fallthru
          _
      $region52: #{tpu_custom_call.1} parent=5 // pred_fallthru
        _
      %p995 = scmp.le.s32.totalorder 2, %s24
      // Predicated region
      $region77: #{tpu_custom_call.1} parent=5 // pred_check
        %p996 = pneg %p995
      $region78: #{tpu_custom_call.1} parent=5 // pred_check_branch
        %998 = sbr.rel (%p996) target = $region80
      $region79: #{tpu_custom_call.1} parent=5 // pred_region
        %s999 = ssub.s32 %s24, 2
        // Predicated region
        $region81: #{tpu_custom_call.1} parent=79 // pred_check
          %p1000 = pneg %p247
        $region82: #{tpu_custom_call.1} parent=79 // pred_check_branch
          %1002 = sbr.rel (%p1000) target = $region84
        $region83: #{tpu_custom_call.1} parent=79 // pred_region
          %s1003 = sand.u32 %s232, 1
          %s1004 = scalar_lea.sflag [#allocation4], %s1003
          %s1005 = sand.u32 %s232, 1
          %s1006 = smul.addr %s1005, 48
          %s1007 = scalar_lea.vmem [#allocation11], %s1006
          %1008 = dma.done %s1004, 768
        $region84: #{tpu_custom_call.1} parent=79 // pred_fallthru
          _
      $region80: #{tpu_custom_call.1} parent=5 // pred_fallthru
        _
    $region6: #{tpu_custom_call.1} parent=1 // loop_footer
      %s28 = sadd.s32 1, %s24
    $region7: #{tpu_custom_call.1} parent=1 // loop_footer_branch
      %23 = sbr.rel target = $region3
    $region8: #{tpu_custom_call.1} parent=1 // loop_exit
      _
    %1009 = vsyncpa [#allocation3], 1
    %s1010 = scalar_lea.sflag [#allocation3], 1
    %1011 = vsyncpa %s1010, 1
    %1012 = vsyncpa [#allocation6], 1
    %s1013 = scalar_lea.sflag [#allocation6], 1
    %1014 = vsyncpa %s1013, 1
    %1015 = vsyncpa [#allocation9], 1
    %1016 = vsyncpa [#allocation4], 1
    %s1017 = scalar_lea.sflag [#allocation4], 1
    %1018 = vsyncpa %s1017, 1

</llo_original>
